<compile_context>
chip_gen: v7x
topology: tpu7x:2x2x1
jax: 0.10.0
libtpu: 0.0.40
codegen_flags: <defaults>
</compile_context>

<pallas_src>
import jax
import jax.numpy as jnp
from jax.experimental import pallas as pl
from jax.experimental.pallas import tpu as pltpu


def _awl_kernel(x_ref, out_ref):
    # x_ref:  (2, N) f32 in VMEM; row 0 = params, row 1 = per-task losses.
    # out_ref: (1,)   f32 in SMEM (scalar result via the scalar path).
    p = x_ref[0:1, :]          # (1, N) params
    l = x_ref[1:2, :]          # (1, N) losses
    p2 = p * p
    # 0.5 / p^2 * loss + log(1 + p^2)
    term = 0.5 * pl.reciprocal(p2, approx=True) * l + jnp.log1p(p2)
    out_ref[0] = jnp.sum(term)


def automatic_weighted_loss(params, losses):
    """params: (N,) learnable weights; losses: (N,) per-task scalar losses.

    Returns a scalar f32 equal to the PyTorch module's forward(*losses).

    Note: for tiny N a plain fused jnp expression in the caller is even cheaper
    than any standalone kernel; the Pallas path is the point of this exercise.
    """
    n = params.shape[0]
    x = jnp.stack(
        [
            jnp.asarray(params, dtype=jnp.float32).reshape(n),
            jnp.asarray(losses, dtype=jnp.float32).reshape(n),
        ],
        axis=0,
    )  # (2, N): one HBM->VMEM transfer instead of two.

    out = pl.pallas_call(
        _awl_kernel,
        out_shape=jax.ShapeDtypeStruct((1,), jnp.float32),
        in_specs=[pl.BlockSpec(memory_space=pltpu.MemorySpace.VMEM)],
        out_specs=pl.BlockSpec(memory_space=pltpu.MemorySpace.SMEM),
    )(x)
    # TODO(synk): if N ever grows to hundreds/thousands of tasks, switch to a
    # lane-dense tiled grid (blocks of (1, 128*k), "arbitrary" reduction axis)
    # with a VMEM accumulator, re-deriving the tile size for v7x's 64 MiB VMEM.
    return out[0]


if __name__ == "__main__":
    num = 2  # matches AutomaticWeightedLoss(num=2)

    # Deterministic parameter init: torch.ones(num) in the module's __init__.
    params = jnp.ones((num,), dtype=jnp.float32)

    # Deterministic example multi-task losses (scalars), like loss1/loss2 in the docstring.
    key = jax.random.PRNGKey(0)
    losses = jax.random.uniform(key, (num,), dtype=jnp.float32, minval=0.5, maxval=2.0)

    result = automatic_weighted_loss(params, losses)
    result = jax.block_until_ready(result)

    # Reference check in plain JAX (same math as the PyTorch forward).
    ref = jnp.sum(0.5 / params**2 * losses + jnp.log(1.0 + params**2))
    assert jnp.allclose(result, ref, rtol=1e-4, atol=1e-6), (result, ref)

    print("KERNEL_OK")
</pallas_src>

<mosaic_0001>
module attributes {stable_mosaic.version = 11 : i64} {
  func.func @_awl_kernel(%arg0: memref<2x2xf32, #tpu.memory_space<vmem>>, %arg1: memref<1xf32, #tpu.memory_space<smem>>) attributes {dimension_semantics = [], scalar_prefetch = 0 : i64, scratch_operands = 0 : i64, tpu.core_type = #tpu.core_type<tc>} {
    %c0 = arith.constant 0 : index
    %c0_0 = arith.constant 0 : index
    %0 = vector.load %arg0[%c0, %c0_0] : memref<2x2xf32, #tpu.memory_space<vmem>>, vector<1x2xf32>
    %c1 = arith.constant 1 : index
    %c0_1 = arith.constant 0 : index
    %1 = vector.load %arg0[%c1, %c0_1] : memref<2x2xf32, #tpu.memory_space<vmem>>, vector<1x2xf32>
    %2 = arith.mulf %0, %0 : vector<1x2xf32>
    %3 = tpu.reciprocal %2 {approx = true} : vector<1x2xf32> -> vector<1x2xf32>
    %cst = arith.constant 5.000000e-01 : f32
    %4 = vector.broadcast %cst : f32 to vector<1x2xf32>
    %5 = arith.mulf %4, %3 : vector<1x2xf32>
    %6 = arith.mulf %5, %1 : vector<1x2xf32>
    %7 = math.log1p %2 : vector<1x2xf32>
    %8 = arith.addf %6, %7 : vector<1x2xf32>
    %9 = vector.shape_cast %8 : vector<1x2xf32> to vector<1x1x2xf32>
    %cst_2 = arith.constant dense<0.000000e+00> : vector<1xf32>
    %10 = vector.multi_reduction <add>, %9, %cst_2 [1, 2] : vector<1x1x2xf32> to vector<1xf32>
    %11 = vector.shape_cast %10 : vector<1xf32> to vector<1x1x1xf32>
    %12 = vector.extract %11[0, 0, 0] : f32 from vector<1x1x1xf32>
    %c0_3 = arith.constant 0 : index
    %13 = memref.load %arg1[%c0_3] : memref<1xf32, #tpu.memory_space<smem>>
    memref.store %12, %arg1[%c0_3] : memref<1xf32, #tpu.memory_space<smem>>
    return
  }
}

</mosaic_0001>

<llo_original>
// kernel: tpu_custom_call.1
$region0: #{tpu_custom_call.1}
  #allocation0 [shape = 'u32[]', space=smem, size = 0x4, offset = 0x4, fixed_abs, tag = 'smem constant byte address 0x4 - core index']
  #allocation1 [shape = 'u32[144,128]{1,0:T(1,128)}', space=vmem, size = 0x12000, scoped, tag = 'internal scratch']
  %s0 = inlined_call_operand.hbm [shape: f32[2,2], index: 0, kind: input, shape index: {}]
  %s1 = inlined_call_operand.hbm [shape: f32[1], index: 1, kind: output, shape index: {}]
  %s2 = sld [smem:[#allocation0]]
  $region18: #{tpu_custom_call.1} parent=0
    _
  %s4 = ssub.s32 1, %s2
  %s5 = scalar_select 0, %s4, %s2
  $region1: #{tpu_custom_call.1} parent=0
    #allocation2 [shape = 'u8[1024]{0}', space=vmem, size = 0x400, scoped, tag = 'input window, operand 0, single buffered']
    #allocation3 [shape = 's32[1]{0}', space=sflag, size = 0x4, scoped, tag = 'scoped memory for tpu_custom_call.1']
    #allocation4 [shape = 's32[1]{0}', space=sflag, size = 0x4, scoped, tag = 'scoped memory for tpu_custom_call.1']
    #allocation5 [shape = 'u8[512]{0}', space=smem, size = 0x200, scoped, tag = 'output window, operand 0, single buffered']
    %6 = vsyncpa [#allocation3], 0
    %7 = vsyncpa [#allocation4], 0
    // Predicated region
    $region2: #{tpu_custom_call.1} parent=1 // pred_check
      _
    $region3: #{tpu_custom_call.1} parent=1 // pred_check_branch
      %9 = sbr.rel (0) target = $region5
    $region4: #{tpu_custom_call.1} parent=1 // pred_region
      %s11 = ssub.s32 32, 32
      %12 = vsyncadd [#allocation3], %s11
      %s14 = sshll.u32 [#allocation2], 4
      %s15 = int_to_ptr.vmem [resolvable:$true] %s14
      %17 = dma.hbm_to_vmem [thread:$0]  %s0, 32, %s15, [#allocation3]
    $region5: #{tpu_custom_call.1} parent=1 // pred_fallthru
      _
    // Predicated region
    $region6: #{tpu_custom_call.1} parent=1 // pred_check
      _
    $region7: #{tpu_custom_call.1} parent=1 // pred_check_branch
      %19 = sbr.rel (0) target = $region9
    $region8: #{tpu_custom_call.1} parent=1 // pred_region
      %20 = dma.done [#allocation3], 32
    $region9: #{tpu_custom_call.1} parent=1 // pred_fallthru
      _
    %v21 = vld [vmem:[#allocation2] sm:$0x1]
    %v22 = vld [vmem:[#allocation2 + $0x1] sm:$0x1]
    %v23 = vmul.f32 %v21, %v21
    %v24 = vrcp.pop %v23
    %v25 = vmul.f32 %v24, 0.5
    %v26 = vmul.f32 %v25, %v22
    %v27 = vadd.f32 %v23, 1.0
    %v28 = vlog2.pop %v27
    %v29 = vmul.f32 %v28, 0.6931472
    %v30 = vmul.f32 -0.5, %v23
    %v31 = vadd.f32 %v30, 1.0
    %v32 = vmul.f32 %v31, %v23
    %v33 = vand.u32 2147483647, %v23
    %vm34 = vcmp.lt.f32.partialorder %v33, 0.0004427343
    %v35 = vsel %vm34, %v32, %v29
    %v36 = vadd.f32 %v26, %v35
    %vm37 = vcmask 8192
    %v38 = vsel %vm37, %v36, 0.0
    %39 = vadd.xlane.f32.xlu0 %v38
    %v40 = vpop.xlane.xlu0 %39
    %v41 = vrot.slane %v40, 4
    %v42 = vadd.f32 %v40, %v41
    %v43 = vrot.slane %v42, 2
    %v44 = vadd.f32 %v42, %v43
    %v45 = vrot.slane %v44, 1
    %v46 = vadd.f32 %v44, %v45
    %s47 = vtos %v46
    %s48 = scalar_lea.smem [#allocation5], 0
    %49 = sst [smem:[%s48]] %s47
    // Predicated region
    $region10: #{tpu_custom_call.1} parent=1 // pred_check
      _
    $region11: #{tpu_custom_call.1} parent=1 // pred_check_branch
      %51 = sbr.rel (0) target = $region13
    $region12: #{tpu_custom_call.1} parent=1 // pred_region
      %s53 = ssub.s32 16, 16
      %54 = vsyncadd [#allocation4], %s53
      %57 = dma.smem_to_hbm [#allocation5], 16, %s1, [#allocation4]
    $region13: #{tpu_custom_call.1} parent=1 // pred_fallthru
      _
    // Predicated region
    $region14: #{tpu_custom_call.1} parent=1 // pred_check
      _
    $region15: #{tpu_custom_call.1} parent=1 // pred_check_branch
      %59 = sbr.rel (0) target = $region17
    $region16: #{tpu_custom_call.1} parent=1 // pred_region
      %60 = dma.done [#allocation4], 16
    $region17: #{tpu_custom_call.1} parent=1 // pred_fallthru
      _
    %61 = sfence
    %62 = vsyncpa [#allocation3], 1
    %63 = vsyncpa [#allocation4], 1

</llo_original>
